<compile_context>
chip_gen: v7x
topology: tpu7x:2x2x1
jax: 0.10.0
libtpu: 0.0.40
codegen_flags: <defaults>
</compile_context>

<pallas_src>
import functools
import math

import jax
import jax.numpy as jnp
from jax import lax
from jax.experimental import pallas as pl
from jax.experimental.pallas import tpu as pltpu

_LANES = 128
_MAX_BLOCK_ROWS = 4096          # 2 MiB per f32 input block per grid step
_ACC_ROWS = 512                 # fixed-size VMEM accumulator (256 KiB f32)
_SMALL_INPUT_BYTES = 1 << 20    # below this, XLA's fused reduce wins
_VMEM_LIMIT_BYTES = 32 << 20    # explicit (v5e scoped default is only 16 MiB)


def _device_kind():
    try:
        return jax.devices()[0].device_kind.lower()
    except Exception:
        return ""


def _is_v7x():
    kind = _device_kind()
    return ("v7" in kind) or ("tpu7" in kind)


def _tensorcores_per_chip():
    # TODO(synk): verify via per-TC profiling that the "parallel" shard axis
    # really lands on both v7x TensorCores (else switch to CORE_PARALLEL /
    # pl.core_map over create_tensorcore_mesh).
    return 2 if _is_v7x() else 1


def _mse_sum_kernel(s_ref, t_ref, o_ref, acc_ref, *, rows, block_rows, acc_rows,
                    folds, bps, nblocks, has_edge):
    c = pl.program_id(0)          # shard axis (parallel; one per TC on v7x)
    i = pl.program_id(1)          # block within shard (arbitrary / reduction)

    @pl.when(i == 0)
    def _():
        acc_ref[...] = jnp.zeros_like(acc_ref)

    d = s_ref[...].astype(jnp.float32) - t_ref[...].astype(jnp.float32)
    sq = d * d

    def _fold(x):
        # Leading-axis sum = pure VALU adds; acc_rows is a multiple of 8 so the
        # reshape never crosses a (8,128) tile boundary.
        if folds == 1:
            return x
        return jnp.sum(x.reshape(folds, acc_rows, _LANES), axis=0)

    if has_edge:
        b = c * bps + i                                   # logical (unclamped) block id
        is_edge = b >= nblocks - 1

        @pl.when(jnp.logical_not(is_edge))
        def _():
            # Steady-state interior block: no mask work at all.
            acc_ref[...] += _fold(sq)

        @pl.when(is_edge)
        def _():
            # Partial last block / clamped spare iterations: zero rows past the
            # true row count.  Must stay a jnp.where (true select) -- data past
            # `rows` may be arbitrary garbage (NaN/Inf) from the boundary DMA.
            row0 = b * block_rows
            row_ids = row0 + lax.broadcasted_iota(jnp.int32, sq.shape, 0)
            acc_ref[...] += _fold(jnp.where(row_ids < rows, sq, 0.0))
    else:
        acc_ref[...] += _fold(sq)

    @pl.when(i == pl.num_programs(1) - 1)
    def _():
        # One sublane reduce per shard; final tiny 128-lane sum done in wrapper.
        o_ref[...] = jnp.sum(acc_ref[...], axis=0, keepdims=True).reshape(
            1, 1, _LANES)


def _to_slab(x):
    """Flatten to a lane-dense (rows, 128) slab.

    Free reshape (no copy) when n % 128 == 0 (the common case for feature
    maps); otherwise pad only to the next multiple of 128.
    """
    flat = x.reshape(-1)
    rem = flat.shape[0] % _LANES
    if rem:
        flat = jnp.pad(flat, (0, _LANES - rem))
    return flat.reshape(flat.shape[0] // _LANES, _LANES)


def _make_in_spec(block_rows, in_map, triple_buffer):
    if triple_buffer:
        try:
            return pl.BlockSpec((block_rows, _LANES), in_map,
                                pipeline_mode=pl.Buffered(3))
        except TypeError:
            pass  # older JAX: fall back to default double-buffering
    return pl.BlockSpec((block_rows, _LANES), in_map)


def hint_loss(f_s, f_t, *, min_pallas_bytes=_SMALL_INPUT_BYTES):
    """MSE loss between student and teacher feature maps (any matching shape)."""
    assert f_s.shape == f_t.shape, "f_s and f_t must have matching shapes"
    n = math.prod(f_s.shape)
    in_bytes = n * (jnp.dtype(f_s.dtype).itemsize + jnp.dtype(f_t.dtype).itemsize)

    if in_bytes < min_pallas_bytes:
        # Tiny inputs: pallas_call launch overhead dwarfs the work; XLA's fused
        # elementwise + reduce is strictly faster here.
        d = f_s.astype(jnp.float32) - f_t.astype(jnp.float32)
        return jnp.mean(d * d).astype(jnp.float32)

    s2d = _to_slab(f_s)
    t2d = _to_slab(f_t)
    rows = s2d.shape[0]

    # Minimum sublane multiple depends on dtype packing (f32:8, bf16:16, 8-bit:32).
    _sub = {4: 8, 2: 16, 1: 32}
    min_sub = max(_sub.get(jnp.dtype(f_s.dtype).itemsize, 8),
                  _sub.get(jnp.dtype(f_t.dtype).itemsize, 8))

    # Block / accumulator sizing. block_rows is always a multiple of acc_rows,
    # and acc_rows is always a multiple of min_sub (or the full row extent).
    if rows >= _ACC_ROWS:
        block_rows = min(_MAX_BLOCK_ROWS, (rows // _ACC_ROWS) * _ACC_ROWS)
        acc_rows = _ACC_ROWS
    elif rows >= min_sub:
        block_rows = (rows // min_sub) * min_sub
        acc_rows = block_rows
    else:
        block_rows = rows          # block == full array dim is always legal
        acc_rows = rows
    folds = block_rows // acc_rows

    nblocks = pl.cdiv(rows, block_rows)
    num_shards = min(_tensorcores_per_chip(), nblocks)   # 1 on v5e/v6e, 2 on v7x
    bps = pl.cdiv(nblocks, num_shards)                   # blocks per shard
    has_edge = (rows % block_rows != 0) or (nblocks != num_shards * bps)

    def in_map(c, i):
        # Clamp so spare iterations stay in bounds; the kernel's edge-branch
        # row mask zeroes their contribution.
        return (jnp.minimum(c * bps + i, nblocks - 1), 0)

    kernel = functools.partial(
        _mse_sum_kernel, rows=rows, block_rows=block_rows, acc_rows=acc_rows,
        folds=folds, bps=bps, nblocks=nblocks, has_edge=has_edge)

    triple_buffer = _is_v7x()

    partials = pl.pallas_call(
        kernel,
        out_shape=jax.ShapeDtypeStruct((num_shards, 1, _LANES), jnp.float32),
        grid_spec=pltpu.PrefetchScalarGridSpec(
            num_scalar_prefetch=0,
            grid=(num_shards, bps),
            in_specs=[
                _make_in_spec(block_rows, in_map, triple_buffer),
                _make_in_spec(block_rows, in_map, triple_buffer),
            ],
            out_specs=pl.BlockSpec((1, 1, _LANES), lambda c, i: (c, 0, 0)),
            scratch_shapes=[pltpu.VMEM((acc_rows, _LANES), jnp.float32)],
        ),
        compiler_params=pltpu.CompilerParams(
            dimension_semantics=("parallel", "arbitrary"),
            vmem_limit_bytes=_VMEM_LIMIT_BYTES,
        ),
        cost_estimate=pl.CostEstimate(
            flops=3 * n, transcendentals=0,
            bytes_accessed=in_bytes + num_shards * _LANES * 4),
    )(s2d, t2d)

    # Masked / zero-padded elements contribute 0; divide by the TRUE count.
    return (jnp.sum(partials) / jnp.float32(n)).astype(jnp.float32)


if __name__ == "__main__":
    key = jax.random.PRNGKey(0)
    k_s, k_t = jax.random.split(key)

    # Small NCHW feature maps: batch=2, channels=4, spatial=16x16.
    f_s = jax.random.normal(k_s, (2, 4, 16, 16), dtype=jnp.float32)
    f_t = jax.random.normal(k_t, (2, 4, 16, 16), dtype=jnp.float32)
    ref = jnp.mean((f_s - f_t) ** 2)

    # 1) Force the Pallas kernel even on this tiny demo shape.
    loss_pallas = hint_loss(f_s, f_t, min_pallas_bytes=0)
    jax.block_until_ready(loss_pallas)
    assert jnp.allclose(loss_pallas, ref, rtol=1e-5, atol=1e-6), (loss_pallas, ref)

    # 2) Default path (tiny input -> XLA fallback) must agree too.
    loss_default = hint_loss(f_s, f_t)
    jax.block_until_ready(loss_default)
    assert jnp.allclose(loss_default, ref, rtol=1e-5, atol=1e-6), (loss_default, ref)

    # 3) Odd, non-128-divisible shape through the Pallas path (lane padding).
    k_s2, k_t2 = jax.random.split(jax.random.PRNGKey(1))
    g_s = jax.random.normal(k_s2, (2, 3, 5, 7), dtype=jnp.float32)
    g_t = jax.random.normal(k_t2, (2, 3, 5, 7), dtype=jnp.float32)
    loss_odd = hint_loss(g_s, g_t, min_pallas_bytes=0)
    jax.block_until_ready(loss_odd)
    ref_odd = jnp.mean((g_s - g_t) ** 2)
    assert jnp.allclose(loss_odd, ref_odd, rtol=1e-5, atol=1e-6), (loss_odd, ref_odd)

    print("KERNEL_OK")
</pallas_src>

<mosaic_0001>
module attributes {stable_mosaic.version = 11 : i64} {
  func.func @_mse_sum_kernel(%arg0: i32, %arg1: i32, %arg2: memref<16x128xf32, #tpu.memory_space<vmem>>, %arg3: memref<16x128xf32, #tpu.memory_space<vmem>>, %arg4: memref<1x1x128xf32, #tpu.memory_space<vmem>>, %arg5: memref<16x128xf32, #tpu.memory_space<vmem>>) attributes {dimension_semantics = [#tpu.dimension_semantics<parallel>, #tpu.dimension_semantics<arbitrary>], iteration_bounds = array<i64: 1, 1>, scalar_prefetch = 0 : i64, scratch_operands = 1 : i64, tpu.core_type = #tpu.core_type<tc>, window_params = [{transform_indices = @transform_0, window_bounds = array<i64: 16, 128>}, {transform_indices = @transform_1, window_bounds = array<i64: 16, 128>}, {transform_indices = @transform_2, window_bounds = array<i64: 1, 1, 128>}]} {
    %c0_i32 = arith.constant 0 : i32
    %0 = arith.cmpi eq, %arg1, %c0_i32 : i32
    %1 = arith.extui %0 : i1 to i32
    %c0_i32_0 = arith.constant 0 : i32
    %2 = arith.cmpi ne, %1, %c0_i32_0 : i32
    scf.if %2 {
      %cst = arith.constant 0.000000e+00 : f32
      %13 = vector.broadcast %cst : f32 to vector<16x128xf32>
      %c0_10 = arith.constant 0 : index
      %c0_11 = arith.constant 0 : index
      %14 = vector.load %arg5[%c0_10, %c0_11] : memref<16x128xf32, #tpu.memory_space<vmem>>, vector<16x128xf32>
      tpu.vector_store %arg5[%c0_10, %c0_11], %13 {strides = array<i32>} : memref<16x128xf32, #tpu.memory_space<vmem>>, vector<16x128xf32>,
    } else {
    }
    %c0 = arith.constant 0 : index
    %c0_1 = arith.constant 0 : index
    %3 = vector.load %arg2[%c0, %c0_1] : memref<16x128xf32, #tpu.memory_space<vmem>>, vector<16x128xf32>
    %c0_2 = arith.constant 0 : index
    %c0_3 = arith.constant 0 : index
    %4 = vector.load %arg3[%c0_2, %c0_3] : memref<16x128xf32, #tpu.memory_space<vmem>>, vector<16x128xf32>
    %5 = arith.subf %3, %4 : vector<16x128xf32>
    %6 = arith.mulf %5, %5 : vector<16x128xf32>
    %c0_4 = arith.constant 0 : index
    %c0_5 = arith.constant 0 : index
    %7 = vector.load %arg5[%c0_4, %c0_5] : memref<16x128xf32, #tpu.memory_space<vmem>>, vector<16x128xf32>
    %8 = arith.addf %7, %6 : vector<16x128xf32>
    %c0_6 = arith.constant 0 : index
    %c0_7 = arith.constant 0 : index
    %9 = vector.load %arg5[%c0_6, %c0_7] : memref<16x128xf32, #tpu.memory_space<vmem>>, vector<16x128xf32>
    tpu.vector_store %arg5[%c0_6, %c0_7], %8 {strides = array<i32>} : memref<16x128xf32, #tpu.memory_space<vmem>>, vector<16x128xf32>,
    %c0_i32_8 = arith.constant 0 : i32
    %10 = arith.cmpi eq, %arg1, %c0_i32_8 : i32
    %11 = arith.extui %10 : i1 to i32
    %c0_i32_9 = arith.constant 0 : i32
    %12 = arith.cmpi ne, %11, %c0_i32_9 : i32
    scf.if %12 {
      %c0_10 = arith.constant 0 : index
      %c0_11 = arith.constant 0 : index
      %13 = vector.load %arg5[%c0_10, %c0_11] : memref<16x128xf32, #tpu.memory_space<vmem>>, vector<16x128xf32>
      %cst = arith.constant dense<0.000000e+00> : vector<128xf32>
      %14 = vector.multi_reduction <add>, %13, %cst [0] : vector<16x128xf32> to vector<128xf32>
      %15 = vector.shape_cast %14 : vector<128xf32> to vector<1x128xf32>
      %16 = vector.shape_cast %15 : vector<1x128xf32> to vector<1x1x128xf32>
      %c0_12 = arith.constant 0 : index
      %c0_13 = arith.constant 0 : index
      %c0_14 = arith.constant 0 : index
      %17 = vector.load %arg4[%c0_12, %c0_13, %c0_14] : memref<1x1x128xf32, #tpu.memory_space<vmem>>, vector<1x1x128xf32>
      tpu.vector_store %arg4[%c0_12, %c0_13, %c0_14], %16 {strides = array<i32>} : memref<1x1x128xf32, #tpu.memory_space<vmem>>, vector<1x1x128xf32>,
    } else {
    }
    return
  }
  func.func @transform_0(%arg0: i32, %arg1: i32) -> (i32, i32) {
    %c1_i32 = arith.constant 1 : i32
    %0 = arith.muli %arg0, %c1_i32 : i32
    %1 = arith.addi %0, %arg1 : i32
    %c0_i32 = arith.constant 0 : i32
    %2 = arith.minsi %1, %c0_i32 : i32
    %c0_i32_0 = arith.constant 0 : i32
    %c0_i32_1 = arith.constant 0 : i32
    return %2, %c0_i32_0 : i32, i32
  }
  func.func @transform_1(%arg0: i32, %arg1: i32) -> (i32, i32) {
    %c1_i32 = arith.constant 1 : i32
    %0 = arith.muli %arg0, %c1_i32 : i32
    %1 = arith.addi %0, %arg1 : i32
    %c0_i32 = arith.constant 0 : i32
    %2 = arith.minsi %1, %c0_i32 : i32
    %c0_i32_0 = arith.constant 0 : i32
    %c0_i32_1 = arith.constant 0 : i32
    return %2, %c0_i32_0 : i32, i32
  }
  func.func @transform_2(%arg0: i32, %arg1: i32) -> (i32, i32, i32) {
    %c0_i32 = arith.constant 0 : i32
    %c0_i32_0 = arith.constant 0 : i32
    %c0_i32_1 = arith.constant 0 : i32
    return %arg0, %c0_i32, %c0_i32_0 : i32, i32, i32
  }
}

</mosaic_0001>

<llo_original>
// kernel: tpu_custom_call.1
$region0: #{tpu_custom_call.1}
  #allocation0 [shape = 'u32[]', space=smem, size = 0x4, offset = 0x4, fixed_abs, tag = 'smem constant byte address 0x4 - core index']
  #allocation1 [shape = 'u32[144,128]{1,0:T(1,128)}', space=vmem, size = 0x12000, scoped, tag = 'internal scratch']
  #allocation2 [shape = 'f32[16,128]{1,0:T(8,128)}', space=vmem, size = 0x2000, scoped, tag = 'scratch operand']
  %s0 = inlined_call_operand.hbm [shape: f32[16,128], index: 0, kind: input, shape index: {}]
  %s1 = inlined_call_operand.hbm [shape: f32[16,128], index: 1, kind: input, shape index: {}]
  %s2 = inlined_call_operand.hbm [shape: f32[1,1,128], index: 2, kind: output, shape index: {}]
  %s3 = sld [smem:[#allocation0]]
  $region34: #{tpu_custom_call.1} parent=0
    _
  %s5 = ssub.s32 1, %s3
  %s6 = scalar_select 0, %s5, %s3
  $region1: #{tpu_custom_call.1} parent=0
    #allocation3 [shape = 'u8[8192]{0}', space=vmem, size = 0x2000, scoped, tag = 'input window, operand 0, single buffered']
    #allocation4 [shape = 's32[1]{0}', space=sflag, size = 0x4, scoped, tag = 'scoped memory for tpu_custom_call.1']
    #allocation5 [shape = 's32[1]{0}', space=sflag, size = 0x4, scoped, tag = 'scoped memory for tpu_custom_call.1']
    #allocation6 [shape = 'u8[8192]{0}', space=vmem, size = 0x2000, scoped, tag = 'input window, operand 1, single buffered']
    #allocation7 [shape = 's32[1]{0}', space=sflag, size = 0x4, scoped, tag = 'scoped memory for tpu_custom_call.1']
    #allocation8 [shape = 'u8[512]{0}', space=vmem, size = 0x400, scoped, tag = 'output window, operand 0, single buffered']
    %7 = vsyncpa [#allocation4], 0
    %8 = vsyncpa [#allocation7], 0
    %9 = vsyncpa [#allocation5], 0
    // Predicated region
    $region2: #{tpu_custom_call.1} parent=1 // pred_check
      _
    $region3: #{tpu_custom_call.1} parent=1 // pred_check_branch
      %11 = sbr.rel (0) target = $region5
    $region4: #{tpu_custom_call.1} parent=1 // pred_region
      %s12 = sadd.s32 0, 0
      %p13 = scmp.lt.s32.totalorder %s12, 0
      %s14 = scalar_select %p13, %s12, 0
      %s15 = smul.u32 2, %s14
      %s17 = ssub.s32 256, 256
      %18 = vsyncadd [#allocation4], %s17
      %s19 = smul.addr %s15, 128
      %s20 = scalar_lea.hbm %s0, %s19
      %s21 = sshll.u32 [#allocation3], 4
      %s22 = int_to_ptr.vmem [resolvable:$true] %s21
      %27 = dma.hbm_to_vmem [thread:$0]  %s20, 256, %s22, [#allocation4], 128, 128, 8
    $region5: #{tpu_custom_call.1} parent=1 // pred_fallthru
      _
    // Predicated region
    $region6: #{tpu_custom_call.1} parent=1 // pred_check
      _
    $region7: #{tpu_custom_call.1} parent=1 // pred_check_branch
      %29 = sbr.rel (0) target = $region9
    $region8: #{tpu_custom_call.1} parent=1 // pred_region
      %s30 = sadd.s32 0, 0
      %p31 = scmp.lt.s32.totalorder %s30, 0
      %s32 = scalar_select %p31, %s30, 0
      %s33 = smul.u32 2, %s32
      %s35 = ssub.s32 256, 256
      %36 = vsyncadd [#allocation7], %s35
      %s37 = smul.addr %s33, 128
      %s38 = scalar_lea.hbm %s1, %s37
      %s39 = sshll.u32 [#allocation6], 4
      %s40 = int_to_ptr.vmem [resolvable:$true] %s39
      %45 = dma.hbm_to_vmem [thread:$0]  %s38, 256, %s40, [#allocation7], 128, 128, 8
    $region9: #{tpu_custom_call.1} parent=1 // pred_fallthru
      _
    // Predicated region
    $region10: #{tpu_custom_call.1} parent=1 // pred_check
      _
    $region11: #{tpu_custom_call.1} parent=1 // pred_check_branch
      %47 = sbr.rel (0) target = $region13
    $region12: #{tpu_custom_call.1} parent=1 // pred_region
      %48 = dma.done [#allocation4], 256
    $region13: #{tpu_custom_call.1} parent=1 // pred_fallthru
      _
    // Predicated region
    $region14: #{tpu_custom_call.1} parent=1 // pred_check
      _
    $region15: #{tpu_custom_call.1} parent=1 // pred_check_branch
      %50 = sbr.rel (0) target = $region17
    $region16: #{tpu_custom_call.1} parent=1 // pred_region
      %51 = dma.done [#allocation7], 256
    $region17: #{tpu_custom_call.1} parent=1 // pred_fallthru
      _
    %s52 = sadd.s32 0, 0
    %p53 = scmp.lt.s32.totalorder %s52, 0
    %s54 = scalar_select %p53, %s52, 0
    %s55 = smul.u32 2, %s54
    %s56 = sadd.s32 0, 0
    %p57 = scmp.lt.s32.totalorder %s56, 0
    %s58 = scalar_select %p57, %s56, 0
    %s59 = smul.u32 2, %s58
    %p60 = scmp.eq.s32.totalorder 0, 0
    // Predicated region
    $region18: #{tpu_custom_call.1} parent=1 // pred_check
      %p61 = pneg %p60
    $region19: #{tpu_custom_call.1} parent=1 // pred_check_branch
      %63 = sbr.rel (%p61) target = $region21
    $region20: #{tpu_custom_call.1} parent=1 // pred_region
      %64 = vst [vmem:[#allocation2] sm:$0xff] 0.0
      %65 = vst [vmem:[#allocation2 + $0x8] sm:$0xff] 0.0
    $region21: #{tpu_custom_call.1} parent=1 // pred_fallthru
      _
    %v66 = vld [vmem:[#allocation3] sm:$0xff]
    %v67 = vld [vmem:[#allocation3 + $0x8] sm:$0xff]
    %v68 = vld [vmem:[#allocation6] sm:$0xff]
    %v69 = vld [vmem:[#allocation6 + $0x8] sm:$0xff]
    %v70 = vsub.f32 %v66, %v68
    %v71 = vsub.f32 %v67, %v69
    %v72 = vmul.f32 %v70, %v70
    %v73 = vmul.f32 %v71, %v71
    %v74 = vld [vmem:[#allocation2] sm:$0xff]
    %v75 = vld [vmem:[#allocation2 + $0x8] sm:$0xff]
    %v76 = vadd.f32 %v74, %v72
    %v77 = vadd.f32 %v75, %v73
    %78 = vst [vmem:[#allocation2] sm:$0xff] %v76
    %79 = vst [vmem:[#allocation2 + $0x8] sm:$0xff] %v77
    // Predicated region
    $region22: #{tpu_custom_call.1} parent=1 // pred_check
      %p80 = pneg %p60
    $region23: #{tpu_custom_call.1} parent=1 // pred_check_branch
      %82 = sbr.rel (%p80) target = $region25
    $region24: #{tpu_custom_call.1} parent=1 // pred_region
      %v83 = vld [vmem:[#allocation2] sm:$0xff]
      %v84 = vld [vmem:[#allocation2 + $0x8] sm:$0xff]
      %v85 = vadd.f32 %v83, %v84
      %v86 = vrot.slane %v85, 4
      %v87 = vadd.f32 %v85, %v86
      %v88 = vrot.slane %v87, 2
      %v89 = vadd.f32 %v87, %v88
      %v90 = vrot.slane %v89, 1
      %v91 = vadd.f32 %v89, %v90
      %92 = vst [vmem:[#allocation8] sm:$0x1] %v91
    $region25: #{tpu_custom_call.1} parent=1 // pred_fallthru
      _
    // Predicated region
    $region26: #{tpu_custom_call.1} parent=1 // pred_check
      _
    $region27: #{tpu_custom_call.1} parent=1 // pred_check_branch
      %94 = sbr.rel (0) target = $region29
    $region28: #{tpu_custom_call.1} parent=1 // pred_region
      %s96 = ssub.s32 16, 16
      %97 = vsyncadd [#allocation5], %s96
      %s99 = sshll.u32 [#allocation8], 4
      %s100 = int_to_ptr.vmem [resolvable:$true] %s99
      %102 = dma.vmem_to_hbm [thread:$0]  %s100, 16, %s2, [#allocation5]
    $region29: #{tpu_custom_call.1} parent=1 // pred_fallthru
      _
    // Predicated region
    $region30: #{tpu_custom_call.1} parent=1 // pred_check
      _
    $region31: #{tpu_custom_call.1} parent=1 // pred_check_branch
      %104 = sbr.rel (0) target = $region33
    $region32: #{tpu_custom_call.1} parent=1 // pred_region
      %105 = dma.done [#allocation5], 16
    $region33: #{tpu_custom_call.1} parent=1 // pred_fallthru
      _
    %106 = vsyncpa [#allocation4], 1
    %107 = vsyncpa [#allocation7], 1
    %108 = vsyncpa [#allocation5], 1

</llo_original>
